<compile_context>
chip_gen: v6e
topology: v6e:2x2x1
jax: 0.10.0
libtpu: 0.0.40
codegen_flags: <defaults>
</compile_context>

<pallas_src>
import jax
import jax.numpy as jnp
from jax.experimental import pallas as pl
from jax.experimental.pallas import tpu as pltpu


def _round_up(x, m):
    return (x + m - 1) // m * m


def _make_kernel(tB, T_tile):
    def kernel(tok_ref, bag_ref, den_ref, emb_row_ref, w_ref, b_ref,
               out_ref, acc_ref):
        i = pl.program_id(0)          # batch tile  ("parallel")
        t = pl.program_id(1)          # token slot  ("arbitrary" reduction)

        @pl.when(t == 0)
        def _():
            acc_ref[...] = jnp.zeros_like(acc_ref)

        flat = i * T_tile + t
        local_bag = bag_ref[flat]                     # bag index within tile
        den = den_ref[flat]                           # bag length (0 => pad slot)
        inv = jnp.where(den > 0,
                        1.0 / jnp.maximum(den, 1).astype(jnp.float32),
                        0.0)
        # gathered embedding row (1, 1, D_pad) bf16 -> (1, D_pad) f32, pre-scaled
        row = emb_row_ref[0].astype(jnp.float32) * inv
        # scatter-add into the bag's accumulator row via a one-hot select
        # (pure VPU work; avoids dynamic VMEM slicing)
        sel = (jax.lax.broadcasted_iota(jnp.int32, (tB, 1), 0)
               == local_bag).astype(jnp.float32)      # (tB, 1)
        acc_ref[...] = acc_ref[...] + sel * row        # (tB, D_pad)

        @pl.when(t == pl.num_programs(1) - 1)
        def _():
            # Linear: (tB, D_pad) @ (D_pad, C_pad) + (1, C_pad); C_pad = 128
            # -> lane-dense unmasked stores.
            out_ref[...] = (jnp.dot(acc_ref[...], w_ref[...],
                                    preferred_element_type=jnp.float32)
                            + b_ref[...])
    return kernel


def text_classification_forward(text, offsets, emb_weight, fc_weight, fc_bias,
                                max_tokens_per_tile=None):
    """Forward pass matching:
         embedded = nn.EmbeddingBag(V, D, mode='mean')(text, offsets)
         return nn.Linear(D, C)(embedded)

    text:    (T,) int32 flat token ids
    offsets: (B,) int32 bag start positions (sorted ascending, offsets[0] == 0)
    """
    T = int(text.shape[0])
    B = int(offsets.shape[0])
    V, D = emb_weight.shape
    C = fc_weight.shape[0]

    lane = 128
    D_pad = _round_up(D, lane)
    C_pad = _round_up(C, lane)

    # Batch tiling: largest tile that still leaves >= 2 tiles (so v7x's second
    # TensorCore has its own batch tile); fall back to a single tile.
    tB = B
    for cand in (256, 128, 64, 32, 16, 8):
        if B % cand == 0 and B // cand >= 2:
            tB = cand
            break
    nB = B // tB

    # ---- O(T) glue: per-tile token layout (no B x V histogram) --------------
    tok_idx = jnp.arange(T, dtype=jnp.int32)
    bag_ids = (jnp.searchsorted(offsets, tok_idx, side='right') - 1).astype(jnp.int32)
    bag_ends = jnp.concatenate([offsets[1:], jnp.array([T], jnp.int32)])
    counts = jnp.maximum(bag_ends - offsets, 1).astype(jnp.int32)        # (B,)

    tile_start = offsets[0::tB]                                          # (nB,)
    tile_end = jnp.concatenate([tile_start[1:], jnp.array([T], jnp.int32)])
    tile_cnt = tile_end - tile_start                                     # (nB,)

    if max_tokens_per_tile is None:
        # Concrete value; pass max_tokens_per_tile explicitly when jitting.
        T_tile = max(int(jnp.max(tile_cnt)), 1)
    else:
        T_tile = int(max_tokens_per_tile)

    tile_of_tok = bag_ids // tB
    slot = tok_idx - tile_start[tile_of_tok]
    flat_pos = tile_of_tok * T_tile + slot            # unique slot per token

    n_flat = nB * T_tile
    # Out-of-range token ids are clamped (PyTorch's EmbeddingBag would raise).
    tok_ids = jnp.clip(text.astype(jnp.int32), 0, V - 1)
    tok_flat = jnp.zeros((n_flat,), jnp.int32).at[flat_pos].set(tok_ids)
    bag_flat = jnp.zeros((n_flat,), jnp.int32).at[flat_pos].set(
        bag_ids - tile_of_tok * tB)
    den_flat = jnp.zeros((n_flat,), jnp.int32).at[flat_pos].set(counts[bag_ids])

    # ---- padded operands -----------------------------------------------------
    # bf16 table halves gathered HBM bytes; all accumulation stays f32.
    emb_p = (jnp.zeros((V, D_pad), jnp.float32).at[:, :D].set(emb_weight)
             .astype(jnp.bfloat16).reshape(V, 1, D_pad))
    w_t = jnp.zeros((D_pad, C_pad), jnp.float32).at[:D, :C].set(fc_weight.T)
    bias = jnp.zeros((1, C_pad), jnp.float32).at[0, :C].set(fc_bias)

    grid_spec = pltpu.PrefetchScalarGridSpec(
        num_scalar_prefetch=3,
        grid=(nB, T_tile),
        in_specs=[
            # data-dependent row gather: one embedding row per token step
            pl.BlockSpec((1, 1, D_pad),
                         lambda i, t, tok, bag, den: (tok[i * T_tile + t], 0, 0)),
            pl.BlockSpec((D_pad, C_pad), lambda i, t, tok, bag, den: (0, 0)),
            pl.BlockSpec((1, C_pad), lambda i, t, tok, bag, den: (0, 0)),
        ],
        out_specs=pl.BlockSpec((tB, C_pad), lambda i, t, tok, bag, den: (i, 0)),
        scratch_shapes=[pltpu.VMEM((tB, D_pad), jnp.float32)],  # f32 bag means
    )

    out_pad = pl.pallas_call(
        _make_kernel(tB, T_tile),
        out_shape=jax.ShapeDtypeStruct((B, C_pad), jnp.float32),
        grid_spec=grid_spec,
        compiler_params=pltpu.CompilerParams(
            dimension_semantics=("parallel", "arbitrary")),
    )(tok_flat, bag_flat, den_flat, emb_p, w_t, bias)

    return out_pad[:, :C]


def reference_forward(text, offsets, emb_weight, fc_weight, fc_bias):
    T = text.shape[0]
    bag_ends = jnp.concatenate([offsets[1:], jnp.array([T], jnp.int32)])
    gathered = emb_weight[text]                                      # (T, D)
    tok_idx = jnp.arange(T)
    member = ((tok_idx[None, :] >= offsets[:, None]) &
              (tok_idx[None, :] < bag_ends[:, None])).astype(jnp.float32)
    counts = jnp.maximum(member.sum(axis=1, keepdims=True), 1.0)
    embedded = (member @ gathered) / counts                          # (B, D)
    return embedded @ fc_weight.T + fc_bias[None, :]


if __name__ == "__main__":
    # small synthetic shapes consistent with the module
    vocab_size = 128
    embed_dim = 64
    num_class = 4
    batch = 16
    tokens_per_bag = 8
    total_tokens = batch * tokens_per_bag        # 128

    key = jax.random.PRNGKey(0)
    k_emb, k_fc, k_text = jax.random.split(key, 3)

    # init_weights(): uniform(-0.5, 0.5) for embedding & fc weight, bias zero
    initrange = 0.5
    emb_weight = jax.random.uniform(k_emb, (vocab_size, embed_dim),
                                    jnp.float32, -initrange, initrange)
    fc_weight = jax.random.uniform(k_fc, (num_class, embed_dim),
                                   jnp.float32, -initrange, initrange)
    fc_bias = jnp.zeros((num_class,), jnp.float32)

    # synthetic "text" + "offsets" (flat token ids, bag start positions)
    text = jax.random.randint(k_text, (total_tokens,), 0, vocab_size,
                              dtype=jnp.int32)
    offsets = jnp.arange(batch, dtype=jnp.int32) * tokens_per_bag

    out = text_classification_forward(text, offsets, emb_weight,
                                      fc_weight, fc_bias)
    out = jax.block_until_ready(out)

    ref = reference_forward(text, offsets, emb_weight, fc_weight, fc_bias)
    assert out.shape == (batch, num_class)
    # bf16 embedding table -> loosened tolerance vs. the f32 reference
    assert jnp.allclose(out, ref, atol=2e-2, rtol=2e-2), (
        float(jnp.max(jnp.abs(out - ref))))

    print("KERNEL_OK")
</pallas_src>

<mosaic_0001>
module attributes {stable_mosaic.version = 11 : i64} {
  func.func @kernel(%arg0: i32, %arg1: i32, %arg2: memref<128xi32, #tpu.memory_space<smem>>, %arg3: memref<128xi32, #tpu.memory_space<smem>>, %arg4: memref<128xi32, #tpu.memory_space<smem>>, %arg5: memref<1x1x128xbf16, #tpu.memory_space<vmem>>, %arg6: memref<128x128xf32, #tpu.memory_space<vmem>>, %arg7: memref<1x128xf32, #tpu.memory_space<vmem>>, %arg8: memref<8x128xf32, #tpu.memory_space<vmem>>, %arg9: memref<8x128xf32, #tpu.memory_space<vmem>>) attributes {dimension_semantics = [#tpu.dimension_semantics<parallel>, #tpu.dimension_semantics<arbitrary>], iteration_bounds = array<i64: 2, 64>, scalar_prefetch = 3 : i64, scratch_operands = 1 : i64, tpu.core_type = #tpu.core_type<tc>, window_params = [{transform_indices = @transform_0, window_bounds = array<i64: 1, 1, 128>}, {pipeline_mode = #tpu.pipeline_mode<synchronous>, transform_indices = @transform_1, window_bounds = array<i64: 128, 128>}, {pipeline_mode = #tpu.pipeline_mode<synchronous>, transform_indices = @transform_2, window_bounds = array<i64: 1, 128>}, {transform_indices = @transform_3, window_bounds = array<i64: 8, 128>}]} {
    %c0_i32 = arith.constant 0 : i32
    %0 = arith.cmpi eq, %arg1, %c0_i32 : i32
    %1 = arith.extui %0 : i1 to i32
    %c0_i32_0 = arith.constant 0 : i32
    %2 = arith.cmpi ne, %1, %c0_i32_0 : i32
    scf.if %2 {
      %cst_10 = arith.constant 0.000000e+00 : f32
      %33 = vector.broadcast %cst_10 : f32 to vector<8x128xf32>
      %c0_11 = arith.constant 0 : index
      %c0_12 = arith.constant 0 : index
      %34 = vector.load %arg9[%c0_11, %c0_12] : memref<8x128xf32, #tpu.memory_space<vmem>>, vector<8x128xf32>
      tpu.vector_store %arg9[%c0_11, %c0_12], %33 {strides = array<i32>} : memref<8x128xf32, #tpu.memory_space<vmem>>, vector<8x128xf32>,
    } else {
    }
    %c64_i32 = arith.constant 64 : i32
    %3 = arith.muli %arg0, %c64_i32 : i32
    %4 = arith.addi %3, %arg1 : i32
    %5 = arith.index_cast %4 : i32 to index
    %6 = memref.load %arg3[%5] : memref<128xi32, #tpu.memory_space<smem>>
    %7 = arith.index_cast %4 : i32 to index
    %8 = memref.load %arg4[%7] : memref<128xi32, #tpu.memory_space<smem>>
    %c0_i32_1 = arith.constant 0 : i32
    %9 = arith.cmpi sgt, %8, %c0_i32_1 : i32
    %c1_i32 = arith.constant 1 : i32
    %10 = arith.maxsi %8, %c1_i32 : i32
    %11 = arith.sitofp %10 : i32 to f32
    %cst = arith.constant 1.000000e+00 : f32
    %12 = arith.divf %cst, %11 : f32
    %cst_2 = arith.constant 0.000000e+00 : f32
    %13 = arith.select %9, %12, %cst_2 : f32
    %c0 = arith.constant 0 : index
    %c0_3 = arith.constant 0 : index
    %c0_4 = arith.constant 0 : index
    %14 = vector.load %arg5[%c0, %c0_3, %c0_4] : memref<1x1x128xbf16, #tpu.memory_space<vmem>>, vector<1x1x128xbf16>
    %15 = vector.shape_cast %14 : vector<1x1x128xbf16> to vector<1x128xbf16>
    %16 = arith.extf %15 : vector<1x128xbf16> to vector<1x128xf32>
    %17 = vector.broadcast %13 : f32 to vector<1x128xf32>
    %18 = arith.mulf %16, %17 : vector<1x128xf32>
    %19 = tpu.iota {dimensions = array<i32: 0>} : vector<8x1xi32>
    %20 = vector.broadcast %6 : i32 to vector<8x1xi32>
    %21 = arith.cmpi eq, %19, %20 : vector<8x1xi32>
    %22 = arith.extui %21 : vector<8x1xi1> to vector<8x1xi32>
    %23 = arith.sitofp %22 : vector<8x1xi32> to vector<8x1xf32>
    %c0_5 = arith.constant 0 : index
    %c0_6 = arith.constant 0 : index
    %24 = vector.load %arg9[%c0_5, %c0_6] : memref<8x128xf32, #tpu.memory_space<vmem>>, vector<8x128xf32>
    %25 = vector.broadcast %23 : vector<8x1xf32> to vector<8x128xf32>
    %26 = vector.broadcast %18 : vector<1x128xf32> to vector<8x128xf32>
    %27 = arith.mulf %25, %26 : vector<8x128xf32>
    %28 = arith.addf %24, %27 : vector<8x128xf32>
    %c0_7 = arith.constant 0 : index
    %c0_8 = arith.constant 0 : index
    %29 = vector.load %arg9[%c0_7, %c0_8] : memref<8x128xf32, #tpu.memory_space<vmem>>, vector<8x128xf32>
    tpu.vector_store %arg9[%c0_7, %c0_8], %28 {strides = array<i32>} : memref<8x128xf32, #tpu.memory_space<vmem>>, vector<8x128xf32>,
    %c63_i32 = arith.constant 63 : i32
    %30 = arith.cmpi eq, %arg1, %c63_i32 : i32
    %31 = arith.extui %30 : i1 to i32
    %c0_i32_9 = arith.constant 0 : i32
    %32 = arith.cmpi ne, %31, %c0_i32_9 : i32
    scf.if %32 {
      %c0_10 = arith.constant 0 : index
      %c0_11 = arith.constant 0 : index
      %33 = vector.load %arg9[%c0_10, %c0_11] : memref<8x128xf32, #tpu.memory_space<vmem>>, vector<8x128xf32>
      %c0_12 = arith.constant 0 : index
      %c0_13 = arith.constant 0 : index
      %34 = vector.load %arg6[%c0_12, %c0_13] : memref<128x128xf32, #tpu.memory_space<vmem>>, vector<128x128xf32>
      %cst_14 = arith.constant dense<0.000000e+00> : vector<8x128xf32>
      %35 = tpu.matmul %33, %34, %cst_14 {dimension_numbers = #tpu.dot_dimension_numbers<[1], [0], [0], [1], [0, 0, 1, 1], [], []>} : vector<8x128xf32>, vector<128x128xf32>, vector<8x128xf32> -> vector<8x128xf32>
      %c0_15 = arith.constant 0 : index
      %c0_16 = arith.constant 0 : index
      %36 = vector.load %arg7[%c0_15, %c0_16] : memref<1x128xf32, #tpu.memory_space<vmem>>, vector<1x128xf32>
      %37 = vector.broadcast %36 : vector<1x128xf32> to vector<8x128xf32>
      %38 = arith.addf %35, %37 : vector<8x128xf32>
      %c0_17 = arith.constant 0 : index
      %c0_18 = arith.constant 0 : index
      %39 = vector.load %arg8[%c0_17, %c0_18] : memref<8x128xf32, #tpu.memory_space<vmem>>, vector<8x128xf32>
      tpu.vector_store %arg8[%c0_17, %c0_18], %38 {strides = array<i32>} : memref<8x128xf32, #tpu.memory_space<vmem>>, vector<8x128xf32>,
    } else {
    }
    return
  }
  func.func @transform_0(%arg0: i32, %arg1: i32, %arg2: memref<128xi32, #tpu.memory_space<smem>>, %arg3: memref<128xi32, #tpu.memory_space<smem>>, %arg4: memref<128xi32, #tpu.memory_space<smem>>) -> (i32, i32, i32) {
    %c64_i32 = arith.constant 64 : i32
    %0 = arith.muli %arg0, %c64_i32 : i32
    %1 = arith.addi %0, %arg1 : i32
    %2 = arith.index_cast %1 : i32 to index
    %3 = memref.load %arg2[%2] : memref<128xi32, #tpu.memory_space<smem>>
    %c0_i32 = arith.constant 0 : i32
    %c0_i32_0 = arith.constant 0 : i32
    %c0_i32_1 = arith.constant 0 : i32
    return %3, %c0_i32, %c0_i32_0 : i32, i32, i32
  }
  func.func @transform_1(%arg0: i32, %arg1: i32, %arg2: memref<128xi32, #tpu.memory_space<smem>>, %arg3: memref<128xi32, #tpu.memory_space<smem>>, %arg4: memref<128xi32, #tpu.memory_space<smem>>) -> (i32, i32) {
    %c0_i32 = arith.constant 0 : i32
    %c0_i32_0 = arith.constant 0 : i32
    %c0_i32_1 = arith.constant 0 : i32
    return %c0_i32, %c0_i32_0 : i32, i32
  }
  func.func @transform_2(%arg0: i32, %arg1: i32, %arg2: memref<128xi32, #tpu.memory_space<smem>>, %arg3: memref<128xi32, #tpu.memory_space<smem>>, %arg4: memref<128xi32, #tpu.memory_space<smem>>) -> (i32, i32) {
    %c0_i32 = arith.constant 0 : i32
    %c0_i32_0 = arith.constant 0 : i32
    %c0_i32_1 = arith.constant 0 : i32
    return %c0_i32, %c0_i32_0 : i32, i32
  }
  func.func @transform_3(%arg0: i32, %arg1: i32, %arg2: memref<128xi32, #tpu.memory_space<smem>>, %arg3: memref<128xi32, #tpu.memory_space<smem>>, %arg4: memref<128xi32, #tpu.memory_space<smem>>) -> (i32, i32) {
    %c0_i32 = arith.constant 0 : i32
    %c0_i32_0 = arith.constant 0 : i32
    return %arg0, %c0_i32 : i32, i32
  }
}

</mosaic_0001>

<llo_original>
// kernel: tpu_custom_call.1
$region0: #{tpu_custom_call.1}
  #allocation0 [shape = 'u32[]', space=smem, size = 0x4, offset = 0x4, fixed_abs, tag = 'smem constant byte address 0x4 - core index']
  #allocation1 [shape = 'u32[144,128]{1,0:T(1,128)}', space=vmem, size = 0x12000, scoped, tag = 'internal scratch']
  #allocation2 [shape = 'f32[8,128]{1,0:T(8,128)}', space=vmem, size = 0x1000, scoped, tag = 'scratch operand']
  #allocation3 [shape = 's32[1]{0}', space=sflag, size = 0x4, scoped, tag = 'scoped memory for tpu_custom_call.1']
  #allocation4 [shape = 'u8[512]{0}', space=smem, size = 0x200, scoped, tag = 'prefetched SMEM operand 0']
  #allocation5 [shape = 'u8[512]{0}', space=smem, size = 0x200, scoped, tag = 'prefetched SMEM operand 1']
  #allocation6 [shape = 'u8[512]{0}', space=smem, size = 0x200, scoped, tag = 'prefetched SMEM operand 2']
  %s0 = inlined_call_operand.vmem [shape: s32[128], index: 0, kind: input, shape index: {}]
  %s1 = inlined_call_operand.vmem [shape: s32[128], index: 1, kind: input, shape index: {}]
  %s2 = inlined_call_operand.vmem [shape: s32[128], index: 2, kind: input, shape index: {}]
  %s3 = inlined_call_operand.vmem [shape: bf16[128,1,128], index: 3, kind: input, shape index: {}]
  %s4 = inlined_call_operand.vmem [shape: f32[128,128], index: 4, kind: input, shape index: {}]
  %s5 = inlined_call_operand.vmem [shape: f32[1,128], index: 5, kind: input, shape index: {}]
  %s6 = inlined_call_operand.hbm [shape: f32[16,128], index: 6, kind: output, shape index: {}]
  %s7 = sld [smem:[#allocation0]]
  $region53: #{tpu_custom_call.1} parent=0
    _
  %s9 = ssub.s32 1, %s7
  %s10 = scalar_select 0, %s9, %s7
  %s11 = sshll.u32 %s0, 4
  %s12 = int_to_ptr.vmem [resolvable:$true] %s11
  %14 = dma.vmem_to_smem %s12, 16, [#allocation4], [#allocation3]
  %s15 = sshll.u32 %s1, 4
  %s16 = int_to_ptr.vmem [resolvable:$true] %s15
  %18 = dma.vmem_to_smem %s16, 16, [#allocation5], [#allocation3]
  %s19 = sshll.u32 %s2, 4
  %s20 = int_to_ptr.vmem [resolvable:$true] %s19
  %22 = dma.vmem_to_smem %s20, 16, [#allocation6], [#allocation3]
  %23 = dma.done [#allocation3], 48
  %24 = sfence
  $region1: #{tpu_custom_call.1} parent=0
    #allocation7 [shape = 'u8[8192]{0}', space=vmem, size = 0x2000, scoped, tag = 'output window, operand 0']
    #allocation8 [shape = 's32[2]{0}', space=sflag, size = 0x8, scoped, tag = 'scoped memory for tpu_custom_call.1']
    %25 = vsyncpa [#allocation8], 0
    %s26 = scalar_lea.sflag [#allocation8], 1
    %27 = vsyncpa %s26, 0
    loop: start=0, step=1, limit=130
    $region2: #{tpu_custom_call.1} parent=1 // loop_pre_header
      _
    $region3: #{tpu_custom_call.1} parent=1 // loop_header
      %s29 = sphi 0, %s33
      %p30 = scmp.ge.s32.totalorder %s29, 130
      %s36 = sphi 0, %s48
      %s37 = sphi 0, %s44
      %s38 = sphi 0, %s36
      %s39 = sphi 0, %s37
      %s40 = sphi 0, %s38
      %s41 = sphi 0, %s39
      %s57 = sphi 0, %s59
      %s60 = sphi 0, %s57
      %s61 = sphi 0, %s60
      %s77 = sphi 0, %s61
      %s81 = sphi 0, %s81
      %s83 = sphi 0, %s81
      %s84 = sphi 0, %s83
      %s98 = sphi 0, %s84
      %s102 = sphi 0, %s102
      %s104 = sphi 0, %s102
      %s105 = sphi 0, %s104
      %s119 = sphi 0, %s105
      %s125 = sphi 0, %s127
      %s128 = sphi 0, %s125
      %s129 = sphi 0, %s128
      %s145 = sphi 0, %s129
    $region4: #{tpu_custom_call.1} parent=1 // loop_header_branch
      %32 = sbr.rel (%p30) target = $region8
    $region5: #{tpu_custom_call.1} parent=1 // loop_body
      %s34 = ssub.s32 %s29, 1
      %s35 = ssub.s32 %s29, 2
      %s42 = sadd.s32 1, %s37
      %p43 = scmp.ge.s32.totalorder %s42, 64
      %s44 = scalar_select %p43, 0, %s42
      %s45 = sadd.s32 1, %s36
      %s46 = scalar_select %p43, %s45, %s36
      %p47 = scmp.ge.s32.totalorder %s46, 2
      %s48 = scalar_select %p47, 0, %s46
      %s49 = smul.u32 %s36, 64
      %s50 = sadd.s32 %s49, %s37
      %s51 = sld [smem:[#allocation4 + %s50]]
      %s52 = smul.u32 %s48, 64
      %s53 = sadd.s32 %s52, %s44
      %s54 = sld [smem:[#allocation4 + %s53]]
      %s55 = ssub.s32 %s51, %s54
      %p56 = scmp.eq.s32.totalorder %s55, 0
      %s58 = sadd.s32 %s57, 1
      %s59 = scalar_select %p56, %s57, %s58
      %p62 = pneg %p56
      %p63 = scmp.eq.s32.totalorder %s29, 127
      %p64 = por %p62, %p63
      %p65 = scmp.ne.s32.totalorder %s57, %s60
      %p66 = scmp.eq.s32.totalorder %s29, 0
      %p67 = por %p65, %p66
      %p68 = scmp.ne.s32.totalorder %s57, %s60
      %p69 = scmp.eq.s32.totalorder %s34, 127
      %p70 = por %p68, %p69
      %p71 = scmp.ne.s32.totalorder %s60, %s61
      %p72 = scmp.eq.s32.totalorder %s34, 0
      %p73 = por %p71, %p72
      %p74 = scmp.ne.s32.totalorder %s60, %s61
      %p75 = scmp.eq.s32.totalorder %s35, 127
      %p76 = por %p74, %p75
      %p78 = scmp.ne.s32.totalorder %s61, %s77
      %p79 = scmp.eq.s32.totalorder %s35, 0
      %p80 = por %p78, %p79
      %s82 = sadd.s32 %s81, 1
      %p85 = scmp.eq.s32.totalorder %s29, 127
      %p86 = scmp.ne.s32.totalorder %s81, %s83
      %p87 = scmp.eq.s32.totalorder %s29, 0
      %p88 = por %p86, %p87
      %p89 = scmp.ne.s32.totalorder %s81, %s83
      %p90 = scmp.eq.s32.totalorder %s34, 127
      %p91 = por %p89, %p90
      %p92 = scmp.ne.s32.totalorder %s83, %s84
      %p93 = scmp.eq.s32.totalorder %s34, 0
      %p94 = por %p92, %p93
      %p95 = scmp.ne.s32.totalorder %s83, %s84
      %p96 = scmp.eq.s32.totalorder %s35, 127
      %p97 = por %p95, %p96
      %p99 = scmp.ne.s32.totalorder %s84, %s98
      %p100 = scmp.eq.s32.totalorder %s35, 0
      %p101 = por %p99, %p100
      %s103 = sadd.s32 %s102, 1
      %p106 = scmp.eq.s32.totalorder %s29, 127
      %p107 = scmp.ne.s32.totalorder %s102, %s104
      %p108 = scmp.eq.s32.totalorder %s29, 0
      %p109 = por %p107, %p108
      %p110 = scmp.ne.s32.totalorder %s102, %s104
      %p111 = scmp.eq.s32.totalorder %s34, 127
      %p112 = por %p110, %p111
      %p113 = scmp.ne.s32.totalorder %s104, %s105
      %p114 = scmp.eq.s32.totalorder %s34, 0
      %p115 = por %p113, %p114
      %p116 = scmp.ne.s32.totalorder %s104, %s105
      %p117 = scmp.eq.s32.totalorder %s35, 127
      %p118 = por %p116, %p117
      %p120 = scmp.ne.s32.totalorder %s105, %s119
      %p121 = scmp.eq.s32.totalorder %s35, 0
      %p122 = por %p120, %p121
      %s123 = ssub.s32 %s36, %s48
      %p124 = scmp.eq.s32.totalorder %s123, 0
      %s126 = sadd.s32 %s125, 1
      %s127 = scalar_select %p124, %s125, %s126
      %p130 = pneg %p124
      %p131 = scmp.eq.s32.totalorder %s29, 127
      %p132 = por %p130, %p131
      %p133 = scmp.ne.s32.totalorder %s125, %s128
      %p134 = scmp.eq.s32.totalorder %s29, 0
      %p135 = por %p133, %p134
      %p136 = scmp.ne.s32.totalorder %s125, %s128
      %p137 = scmp.eq.s32.totalorder %s34, 127
      %p138 = por %p136, %p137
      %p139 = scmp.ne.s32.totalorder %s128, %s129
      %p140 = scmp.eq.s32.totalorder %s34, 0
      %p141 = por %p139, %p140
      %p142 = scmp.ne.s32.totalorder %s128, %s129
      %p143 = scmp.eq.s32.totalorder %s35, 127
      %p144 = por %p142, %p143
      %p146 = scmp.ne.s32.totalorder %s129, %s145
      %p147 = scmp.eq.s32.totalorder %s35, 0
      %p148 = por %p146, %p147
      %p149 = scmp.le.s32.totalorder 1, %s29
      %p150 = scmp.lt.s32.totalorder %s29, 129
      %p151 = pnand %p149, %p150
      %p152 = pneg %p151
      // Predicated region
      $region9: #{tpu_custom_call.1} parent=5 // pred_check
        _
      $region10: #{tpu_custom_call.1} parent=5 // pred_check_branch
        %154 = sbr.rel (%p151) target = $region12
      $region11: #{tpu_custom_call.1} parent=5 // pred_region
        %s155 = ssub.s32 %s29, 1
        // Predicated region
        $region13: #{tpu_custom_call.1} parent=11 // pred_check
          %p156 = pneg %p94
        $region14: #{tpu_custom_call.1} parent=11 // pred_check_branch
          %158 = sbr.rel (%p156) target = $region16
        $region15: #{tpu_custom_call.1} parent=11 // pred_region
          _
        $region16: #{tpu_custom_call.1} parent=11 // pred_fallthru
          _
        // Predicated region
        $region17: #{tpu_custom_call.1} parent=11 // pred_check
          %p159 = pneg %p115
        $region18: #{tpu_custom_call.1} parent=11 // pred_check_branch
          %161 = sbr.rel (%p159) target = $region20
        $region19: #{tpu_custom_call.1} parent=11 // pred_region
          _
        $region20: #{tpu_custom_call.1} parent=11 // pred_fallthru
          _
      $region12: #{tpu_custom_call.1} parent=5 // pred_fallthru
        _
      %p162 = scmp.lt.s32.totalorder %s29, 128
      // Predicated region
      $region21: #{tpu_custom_call.1} parent=5 // pred_check
        %p163 = pneg %p162
      $region22: #{tpu_custom_call.1} parent=5 // pred_check_branch
        %165 = sbr.rel (%p163) target = $region24
      $region23: #{tpu_custom_call.1} parent=5 // pred_region
        // Predicated region
        $region25: #{tpu_custom_call.1} parent=23 // pred_check
          %p166 = pneg %p67
        $region26: #{tpu_custom_call.1} parent=23 // pred_check_branch
          %168 = sbr.rel (%p166) target = $region28
        $region27: #{tpu_custom_call.1} parent=23 // pred_region
          %s169 = smul.u32 %s36, 64
          %s170 = sadd.s32 %s169, %s37
          %s171 = sld [smem:[#allocation4 + %s170]]
          %p172 = scmp.lt.s32.totalorder %s171, 127
          %s173 = scalar_select %p172, %s171, 127
          %s174 = scalar_lea.vmem %s3, %s173
          %s175 = smul.u32 %s36, 64
          %s176 = sadd.s32 %s175, %s37
          %s177 = sld [smem:[#allocation4 + %s176]]
        $region28: #{tpu_custom_call.1} parent=23 // pred_fallthru
          _
      $region24: #{tpu_custom_call.1} parent=5 // pred_fallthru
        _
      %p178 = scmp.le.s32.totalorder 1, %s29
      %p179 = scmp.lt.s32.totalorder %s29, 129
      %p180 = pnand %p178, %p179
      %p181 = pneg %p180
      // Predicated region
      $region29: #{tpu_custom_call.1} parent=5 // pred_check
        _
      $region30: #{tpu_custom_call.1} parent=5 // pred_check_branch
        %183 = sbr.rel (%p180) target = $region32
      $region31: #{tpu_custom_call.1} parent=5 // pred_region
        %s184 = ssub.s32 %s29, 1
        %s185 = smul.u32 %s38, 64
        %s186 = sadd.s32 %s185, %s39
        %s187 = sld [smem:[#allocation4 + %s186]]
        %p188 = scmp.lt.s32.totalorder %s187, 127
        %s189 = scalar_select %p188, %s187, 127
        %s190 = scalar_lea.vmem %s3, %s189
        %p191 = pneg %p73
        %p192 = pneg %p70
        %p193 = pneg %p94
        %p194 = pneg %p91
        %p195 = pneg %p115
        %p196 = pneg %p112
        %p197 = pneg %p141
        %p198 = pneg %p138
        %s199 = sand.u32 %s128, 1
        %s200 = scalar_lea.sflag [#allocation8], %s199
        %s201 = sand.u32 %s128, 1
        %s202 = smul.addr %s201, 8
        %s203 = scalar_lea.vmem [#allocation7], %s202
        %s204 = smul.u32 %s38, 64
        %s205 = sadd.s32 %s204, %s39
        %s206 = sld [smem:[#allocation4 + %s205]]
        %p207 = scmp.lt.s32.totalorder %s206, 127
        %s208 = scalar_select %p207, %s206, 127
        %s209 = scalar_lea.vmem %s3, %s208
        %s210 = smul.u32 %s38, 64
        %s211 = sadd.s32 %s210, %s39
        %s212 = sld [smem:[#allocation4 + %s211]]
        %p213 = scmp.eq.s32.totalorder %s39, 0
        // Predicated region
        $region33: #{tpu_custom_call.1} parent=31 // pred_check
          %p214 = pneg %p213
        $region34: #{tpu_custom_call.1} parent=31 // pred_check_branch
          %216 = sbr.rel (%p214) target = $region36
        $region35: #{tpu_custom_call.1} parent=31 // pred_region
          %217 = vst [vmem:[#allocation2] sm:$0xff] 0.0
        $region36: #{tpu_custom_call.1} parent=31 // pred_fallthru
          _
        %s218 = smul.u32 %s38, 64
        %s219 = sadd.s32 %s218, %s39
        %s220 = sld [smem:[#allocation5 + %s219]]
        %s221 = sld [smem:[#allocation6 + %s219]]
        %p222 = scmp.gt.s32.totalorder %s221, 0
        %p223 = scmp.gt.s32.totalorder %s221, 1
        %s224 = scalar_select %p223, %s221, 1
        %s225 = scvt.s32.f32 %s224
        %v226 = vstv %s225
        %v227 = vrcp.pop %v226
        %s228 = vtos %v227
        %s229 = scalar_select %p222, %s228, 0.0
        %v230 = vld [vmem:[%s209] sm:$0x1]
        %v231 = vunpack.c.l.bf16 %v230
        %v232 = vstv %s229
        %v233 = vmul.f32 %v231, %v232
        %v234 = vlaneseq
        %v235 = vshrl.u32 %v234, 7
        %v236 = vstv %s220
        %vm237 = vcmp.eq.s32.totalorder %v235, %v236
        %v238 = vsel %vm237, 1, 0
        %v239 = vcvt.s32.f32 %v238
        %v240 = vld [vmem:[#allocation2] sm:$0xff]
        %v241 = vlaneseq
        %v242 = vshrl.u32 %v241, 7
        %v243 = vsub.s32 0, %v242
        %v244 = vrot.slane %v233, %v243
        %v245 = vmul.f32 %v239, %v244
        %v246 = vadd.f32 %v240, %v245
        %247 = vst [vmem:[#allocation2] sm:$0xff] %v246
        %p248 = scmp.eq.s32.totalorder %s39, 63
        // Predicated region
        $region37: #{tpu_custom_call.1} parent=31 // pred_check
          %p249 = pneg %p248
        $region38: #{tpu_custom_call.1} parent=31 // pred_check_branch
          %251 = sbr.rel (%p249) target = $region40
        $region39: #{tpu_custom_call.1} parent=31 // pred_region
          %v252 = vld [vmem:[#allocation2] sm:$0xff]
          %v253 = vld [vmem:[%s4] sm:$0xff]
          %v254 = vld [vmem:[%s4 + $0x8] sm:$0xff]
          %v255 = vld [vmem:[%s4 + $0x10] sm:$0xff]
          %v256 = vld [vmem:[%s4 + $0x18] sm:$0xff]
          %v257 = vld [vmem:[%s4 + $0x20] sm:$0xff]
          %v258 = vld [vmem:[%s4 + $0x28] sm:$0xff]
          %v259 = vld [vmem:[%s4 + $0x30] sm:$0xff]
          %v260 = vld [vmem:[%s4 + $0x38] sm:$0xff]
          %v261 = vld [vmem:[%s4 + $0x40] sm:$0xff]
          %v262 = vld [vmem:[%s4 + $0x48] sm:$0xff]
          %v263 = vld [vmem:[%s4 + $0x50] sm:$0xff]
          %v264 = vld [vmem:[%s4 + $0x58] sm:$0xff]
          %v265 = vld [vmem:[%s4 + $0x60] sm:$0xff]
          %v266 = vld [vmem:[%s4 + $0x68] sm:$0xff]
          %v267 = vld [vmem:[%s4 + $0x70] sm:$0xff]
          %v268 = vld [vmem:[%s4 + $0x78] sm:$0xff]
          %v269 = vld [vmem:[%s5] sm:$0x1]
          %v271 = vlaneseq
          %v272 = vshrl.u32 %v271, 7
          %v273 = vsub.s32 0, %v272
          %v274 = vrot.slane %v269, %v273
          %276 = vmatprep.subr.mxu0 0.0
          %277 = vmatpush1.msra.mxu0 %v268
          %278 = vmatprep.subr.mxu0 0.0
          %279 = vmatpush1.msra.mxu0 %v267
          %280 = vmatprep.subr.mxu0 0.0
          %281 = vmatpush1.msra.mxu0 %v266
          %282 = vmatprep.subr.mxu0 0.0
          %283 = vmatpush1.msra.mxu0 %v265
          %284 = vmatprep.subr.mxu0 0.0
          %285 = vmatpush1.msra.mxu0 %v264
          %286 = vmatprep.subr.mxu0 0.0
          %287 = vmatpush1.msra.mxu0 %v263
          %288 = vmatprep.subr.mxu0 0.0
          %289 = vmatpush1.msra.mxu0 %v262
          %290 = vmatprep.subr.mxu0 0.0
          %291 = vmatpush1.msra.mxu0 %v261
          %292 = vmatprep.subr.mxu0 0.0
          %293 = vmatpush1.msra.mxu0 %v260
          %294 = vmatprep.subr.mxu0 0.0
          %295 = vmatpush1.msra.mxu0 %v259
          %296 = vmatprep.subr.mxu0 0.0
          %297 = vmatpush1.msra.mxu0 %v258
          %298 = vmatprep.subr.mxu0 0.0
          %299 = vmatpush1.msra.mxu0 %v257
          %300 = vmatprep.subr.mxu0 0.0
          %301 = vmatpush1.msra.mxu0 %v256
          %302 = vmatprep.subr.mxu0 0.0
          %303 = vmatpush1.msra.mxu0 %v255
          %304 = vmatprep.subr.mxu0 0.0
          %305 = vmatpush1.msra.mxu0 %v254
          %306 = vmatprep.subr.mxu0 0.0
          %307 = vmatpush1.msra.mxu0 %v253
          %308 = vmatprep.subr.mxu0 0.0
          %309 = vmatpush2.msra.mxu0 0.0
          %310 = vmatprep.subr.mxu0 0.0
          %311 = vmatpush2.msra.mxu0 0.0
          %312 = vmatprep.subr.mxu0 0.0
          %313 = vmatpush2.msra.mxu0 0.0
          %314 = vmatprep.subr.mxu0 0.0
          %315 = vmatpush2.msra.mxu0 0.0
          %316 = vmatprep.subr.mxu0 0.0
          %317 = vmatpush2.msra.mxu0 0.0
          %318 = vmatprep.subr.mxu0 0.0
          %319 = vmatpush2.msra.mxu0 0.0
          %320 = vmatprep.subr.mxu0 0.0
          %321 = vmatpush2.msra.mxu0 0.0
          %322 = vmatprep.subr.mxu0 0.0
          %323 = vmatpush2.msra.mxu0 0.0
          %324 = vmatprep.subr.mxu0 0.0
          %325 = vmatpush2.msra.mxu0 0.0
          %326 = vmatprep.subr.mxu0 0.0
          %327 = vmatpush2.msra.mxu0 0.0
          %328 = vmatprep.subr.mxu0 0.0
          %329 = vmatpush2.msra.mxu0 0.0
          %330 = vmatprep.subr.mxu0 0.0
          %331 = vmatpush2.msra.mxu0 0.0
          %332 = vmatprep.subr.mxu0 0.0
          %333 = vmatpush2.msra.mxu0 0.0
          %334 = vmatprep.subr.mxu0 0.0
          %335 = vmatpush2.msra.mxu0 0.0
          %336 = vmatprep.subr.mxu0 0.0
          %337 = vmatpush2.msra.mxu0 0.0
          %338 = vmatprep.subr.mxu0 0.0
          %339 = vmatpush2.msra.mxu0 0.0
          %340 = vmatprep.mubr.f32.mxu0 0.0
          %341 = vmatmul.mubr.f32.gmra.mxu0 %v252
          %v342 = vpop.f32.mrf.mxu0
          %v343 = vadd.f32 %v274, %v342
          %v344 = vpop.f32.mrf.mxu0
          %345 = vdwg.mxu0
          %346 = vst [vmem:[%s203] sm:$0xff] %v343
        $region40: #{tpu_custom_call.1} parent=31 // pred_fallthru
          _
        %s347 = sand.u32 %s128, 1
        %s348 = scalar_lea.sflag [#allocation8], %s347
        %s349 = sand.u32 %s128, 1
        %s350 = smul.addr %s349, 8
        %s351 = scalar_lea.vmem [#allocation7], %s350
        // Predicated region
        $region41: #{tpu_custom_call.1} parent=31 // pred_check
          %p352 = pneg %p138
        $region42: #{tpu_custom_call.1} parent=31 // pred_check_branch
          %354 = sbr.rel (%p352) target = $region44
        $region43: #{tpu_custom_call.1} parent=31 // pred_region
          %s356 = ssub.s32 128, 128
          %357 = vsyncadd %s348, %s356
          %s358 = smul.addr %s38, 128
          %s359 = scalar_lea.hbm %s6, %s358
          %s361 = sshll.u32 %s351, 4
          %s362 = int_to_ptr.vmem [resolvable:$true] %s361
          %364 = dma.vmem_to_hbm [thread:$0]  %s362, 128, %s359, %s348
        $region44: #{tpu_custom_call.1} parent=31 // pred_fallthru
          _
      $region32: #{tpu_custom_call.1} parent=5 // pred_fallthru
        _
      %p365 = scmp.le.s32.totalorder 2, %s29
      // Predicated region
      $region45: #{tpu_custom_call.1} parent=5 // pred_check
        %p366 = pneg %p365
      $region46: #{tpu_custom_call.1} parent=5 // pred_check_branch
        %368 = sbr.rel (%p366) target = $region48
      $region47: #{tpu_custom_call.1} parent=5 // pred_region
        %s369 = ssub.s32 %s29, 2
        // Predicated region
        $region49: #{tpu_custom_call.1} parent=47 // pred_check
          %p370 = pneg %p144
        $region50: #{tpu_custom_call.1} parent=47 // pred_check_branch
          %372 = sbr.rel (%p370) target = $region52
        $region51: #{tpu_custom_call.1} parent=47 // pred_region
          %s373 = sand.u32 %s129, 1
          %s374 = scalar_lea.sflag [#allocation8], %s373
          %s375 = sand.u32 %s129, 1
          %s376 = smul.addr %s375, 8
          %s377 = scalar_lea.vmem [#allocation7], %s376
          %378 = dma.done %s374, 128
        $region52: #{tpu_custom_call.1} parent=47 // pred_fallthru
          _
      $region48: #{tpu_custom_call.1} parent=5 // pred_fallthru
        _
    $region6: #{tpu_custom_call.1} parent=1 // loop_footer
      %s33 = sadd.s32 1, %s29
    $region7: #{tpu_custom_call.1} parent=1 // loop_footer_branch
      %28 = sbr.rel target = $region3
    $region8: #{tpu_custom_call.1} parent=1 // loop_exit
      _
    %379 = vsyncpa [#allocation8], 1
    %s380 = scalar_lea.sflag [#allocation8], 1
    %381 = vsyncpa %s380, 1

</llo_original>
